<compile_context>
chip_gen: v6e
topology: v6e:2x2x1
jax: 0.10.0
libtpu: 0.0.40
codegen_flags: <defaults>
</compile_context>

<pallas_src>
import functools

import jax
import jax.numpy as jnp
from jax.experimental import pallas as pl
from jax.experimental.pallas import tpu as pltpu

_LANE = 128     # lane width -> lane-dense padded class dim
_SUBLANE = 8    # sublane alignment for the batch tile


def _round_up(n, m):
    return ((n + m - 1) // m) * m


def _mlp_kernel(x_ref, w1_ref, w2_ref, out_ref):
    # fc1 (+ bias via augmented column) : (TB, Din+1) @ (Din+1, H+1)
    h = jnp.dot(x_ref[...], w1_ref[...], preferred_element_type=jnp.float32)
    # ReLU (the augmented "ones" column holds 1.0, relu(1)=1, so it survives)
    h = jnp.maximum(h, 0.0)
    # fc2 (+ bias via augmented row) : (TB, H+1) @ (H+1, C_pad)
    o = jnp.dot(h, w2_ref[...], preferred_element_type=jnp.float32)
    out_ref[...] = o.astype(out_ref.dtype)


@functools.partial(jax.jit, static_argnames=("block_batch",))
def net_forward(x, w1, b1, w2, b2, *, block_batch=1024):
    """Forward pass equivalent to Net.forward.

    x:  (batch, input_size)           float32
    w1: (input_size, hidden_size)     float32   (transpose of PyTorch layout)
    b1: (1, hidden_size) or (hidden_size,)
    w2: (hidden_size, num_classes)
    b2: (1, num_classes) or (num_classes,)
    returns (batch, num_classes) float32
    """
    batch, d_in = x.shape
    hidden = w1.shape[1]
    num_classes = w2.shape[1]
    c_pad = _LANE  # lane-dense padded output width

    # ---- fold biases into augmented weight matrices (done once, in wrapper) ----
    # w1_aug: (d_in+1, hidden+1); last row carries b1, last column carries the 1
    # so that h_aug = relu(x_aug @ w1_aug) automatically has ones in column H.
    w1_aug = jnp.zeros((d_in + 1, hidden + 1), jnp.float32)
    w1_aug = w1_aug.at[:d_in, :hidden].set(w1.astype(jnp.float32))
    w1_aug = w1_aug.at[d_in, :hidden].set(jnp.reshape(b1, (-1,)).astype(jnp.float32))
    w1_aug = w1_aug.at[d_in, hidden].set(1.0)

    # w2_aug: (hidden+1, c_pad); last row carries b2; extra class lanes are zero.
    w2_aug = jnp.zeros((hidden + 1, c_pad), jnp.float32)
    w2_aug = w2_aug.at[:hidden, :num_classes].set(w2.astype(jnp.float32))
    w2_aug = w2_aug.at[hidden, :num_classes].set(jnp.reshape(b2, (-1,)).astype(jnp.float32))

    # ---- augment + pad the batch ----
    x_aug = jnp.concatenate(
        [x.astype(jnp.float32), jnp.ones((batch, 1), jnp.float32)], axis=1
    )
    tb = min(block_batch, _round_up(batch, _SUBLANE))
    padded_batch = _round_up(batch, tb)
    if padded_batch != batch:
        # Padded rows are all-zero (ones column included) -> produce zeros; sliced off.
        x_aug = jnp.pad(x_aug, ((0, padded_batch - batch), (0, 0)))

    grid = (padded_batch // tb,)

    out_padded = pl.pallas_call(
        _mlp_kernel,
        out_shape=jax.ShapeDtypeStruct((padded_batch, c_pad), jnp.float32),
        grid=grid,
        in_specs=[
            # x tile marches over the batch; last dim equals full array dim (d_in+1).
            pl.BlockSpec((tb, d_in + 1), lambda i: (i, 0)),
            # weights: full blocks, resident across all grid steps.
            pl.BlockSpec((d_in + 1, hidden + 1), lambda i: (0, 0)),
            pl.BlockSpec((hidden + 1, c_pad), lambda i: (0, 0)),
        ],
        # lane-dense output tile: last dim is 128.
        out_specs=pl.BlockSpec((tb, c_pad), lambda i: (i, 0)),
        compiler_params=pltpu.CompilerParams(
            dimension_semantics=("parallel",),  # megacore sharding on v7x
        ),
    )(x_aug, w1_aug, w2_aug)

    return out_padded[:batch, :num_classes]


def init_params(key, input_size, hidden_size, num_classes):
    """Deterministic init mimicking PyTorch Linear's U(-1/sqrt(fan_in), +1/sqrt(fan_in))."""
    k1, k2, k3, k4 = jax.random.split(key, 4)
    bound1 = 1.0 / jnp.sqrt(jnp.float32(input_size))
    bound2 = 1.0 / jnp.sqrt(jnp.float32(hidden_size))
    w1 = jax.random.uniform(k1, (input_size, hidden_size), jnp.float32, -bound1, bound1)
    b1 = jax.random.uniform(k2, (1, hidden_size), jnp.float32, -bound1, bound1)
    w2 = jax.random.uniform(k3, (hidden_size, num_classes), jnp.float32, -bound2, bound2)
    b2 = jax.random.uniform(k4, (1, num_classes), jnp.float32, -bound2, bound2)
    return w1, b1, w2, b2


if __name__ == "__main__":
    # Diabetes dataset: 8 input features, hidden_size=16, num_classes=2.
    input_size = 8
    hidden_size = 16
    num_classes = 2
    batch = 8

    key = jax.random.PRNGKey(0)
    kx, kp = jax.random.split(key)
    x = jax.random.normal(kx, (batch, input_size), dtype=jnp.float32)
    w1, b1, w2, b2 = init_params(kp, input_size, hidden_size, num_classes)

    out = net_forward(x, w1, b1, w2, b2)
    out = jax.block_until_ready(out)

    # Reference check in plain JAX (same semantics as the PyTorch forward).
    ref = jnp.maximum(x @ w1 + b1, 0.0) @ w2 + b2
    assert out.shape == (batch, num_classes)
    assert jnp.allclose(out, ref, atol=1e-5, rtol=1e-5), (out, ref)

    # Also exercise a non-tiny, non-multiple batch to verify grid + padding paths.
    big_batch = 1000  # not a multiple of the 1024 tile or of 8
    xb = jax.random.normal(jax.random.PRNGKey(1), (big_batch, input_size), jnp.float32)
    out_big = jax.block_until_ready(net_forward(xb, w1, b1, w2, b2))
    ref_big = jnp.maximum(xb @ w1 + b1, 0.0) @ w2 + b2
    assert out_big.shape == (big_batch, num_classes)
    assert jnp.allclose(out_big, ref_big, atol=1e-5, rtol=1e-5)

    print("KERNEL_OK")
</pallas_src>

<mosaic_0001>
module attributes {stable_mosaic.version = 11 : i64} {
  func.func @_mlp_kernel(%arg0: i32, %arg1: memref<8x9xf32, #tpu.memory_space<vmem>>, %arg2: memref<9x17xf32, #tpu.memory_space<vmem>>, %arg3: memref<17x128xf32, #tpu.memory_space<vmem>>, %arg4: memref<8x128xf32, #tpu.memory_space<vmem>>) attributes {dimension_semantics = [#tpu.dimension_semantics<parallel>], iteration_bounds = array<i64: 1>, scalar_prefetch = 0 : i64, scratch_operands = 0 : i64, tpu.core_type = #tpu.core_type<tc>, window_params = [{transform_indices = @transform_0, window_bounds = array<i64: 8, 9>}, {pipeline_mode = #tpu.pipeline_mode<synchronous>, transform_indices = @transform_1, window_bounds = array<i64: 9, 17>}, {pipeline_mode = #tpu.pipeline_mode<synchronous>, transform_indices = @transform_2, window_bounds = array<i64: 17, 128>}, {transform_indices = @transform_3, window_bounds = array<i64: 8, 128>}]} {
    %c0 = arith.constant 0 : index
    %c0_0 = arith.constant 0 : index
    %0 = vector.load %arg1[%c0, %c0_0] : memref<8x9xf32, #tpu.memory_space<vmem>>, vector<8x9xf32>
    %c0_1 = arith.constant 0 : index
    %c0_2 = arith.constant 0 : index
    %1 = vector.load %arg2[%c0_1, %c0_2] : memref<9x17xf32, #tpu.memory_space<vmem>>, vector<9x17xf32>
    %cst = arith.constant dense<0.000000e+00> : vector<8x17xf32>
    %2 = tpu.matmul %0, %1, %cst {dimension_numbers = #tpu.dot_dimension_numbers<[1], [0], [0], [1], [0, 0, 1, 1], [], []>} : vector<8x9xf32>, vector<9x17xf32>, vector<8x17xf32> -> vector<8x17xf32>
    %cst_3 = arith.constant 0.000000e+00 : f32
    %3 = vector.broadcast %cst_3 : f32 to vector<8x17xf32>
    %4 = arith.maximumf %2, %3 : vector<8x17xf32>
    %c0_4 = arith.constant 0 : index
    %c0_5 = arith.constant 0 : index
    %5 = vector.load %arg3[%c0_4, %c0_5] : memref<17x128xf32, #tpu.memory_space<vmem>>, vector<17x128xf32>
    %cst_6 = arith.constant dense<0.000000e+00> : vector<8x128xf32>
    %6 = tpu.matmul %4, %5, %cst_6 {dimension_numbers = #tpu.dot_dimension_numbers<[1], [0], [0], [1], [0, 0, 1, 1], [], []>} : vector<8x17xf32>, vector<17x128xf32>, vector<8x128xf32> -> vector<8x128xf32>
    %c0_7 = arith.constant 0 : index
    %c0_8 = arith.constant 0 : index
    %7 = vector.load %arg4[%c0_7, %c0_8] : memref<8x128xf32, #tpu.memory_space<vmem>>, vector<8x128xf32>
    tpu.vector_store %arg4[%c0_7, %c0_8], %6 {strides = array<i32>} : memref<8x128xf32, #tpu.memory_space<vmem>>, vector<8x128xf32>,
    return
  }
  func.func @transform_0(%arg0: i32) -> (i32, i32) {
    %c0_i32 = arith.constant 0 : i32
    %c0_i32_0 = arith.constant 0 : i32
    return %arg0, %c0_i32 : i32, i32
  }
  func.func @transform_1(%arg0: i32) -> (i32, i32) {
    %c0_i32 = arith.constant 0 : i32
    %c0_i32_0 = arith.constant 0 : i32
    %c0_i32_1 = arith.constant 0 : i32
    return %c0_i32, %c0_i32_0 : i32, i32
  }
  func.func @transform_2(%arg0: i32) -> (i32, i32) {
    %c0_i32 = arith.constant 0 : i32
    %c0_i32_0 = arith.constant 0 : i32
    %c0_i32_1 = arith.constant 0 : i32
    return %c0_i32, %c0_i32_0 : i32, i32
  }
  func.func @transform_3(%arg0: i32) -> (i32, i32) {
    %c0_i32 = arith.constant 0 : i32
    %c0_i32_0 = arith.constant 0 : i32
    return %arg0, %c0_i32 : i32, i32
  }
}

</mosaic_0001>

<llo_original>
// kernel: net_forward.1
$region0: #{net_forward.1}
  #allocation0 [shape = 'u32[]', space=smem, size = 0x4, offset = 0x4, fixed_abs, tag = 'smem constant byte address 0x4 - core index']
  #allocation1 [shape = 'u32[144,128]{1,0:T(1,128)}', space=vmem, size = 0x12000, scoped, tag = 'internal scratch']
  %s0 = inlined_call_operand.vmem [shape: f32[8,9], index: 0, kind: input, shape index: {}]
  %s1 = inlined_call_operand.vmem [shape: f32[9,17], index: 1, kind: input, shape index: {}]
  %s2 = inlined_call_operand.vmem [shape: f32[17,128], index: 2, kind: input, shape index: {}]
  %s3 = inlined_call_operand.vmem [shape: f32[8,128], index: 3, kind: output, shape index: {}]
  %s4 = sld [smem:[#allocation0]]
  $region22: #{net_forward.1} parent=0
    _
  %s6 = ssub.s32 1, %s4
  %s7 = scalar_select 0, %s6, %s4
  // Predicated region
  $region2: #{net_forward.1} parent=0 // pred_check
    _
  $region3: #{net_forward.1} parent=0 // pred_check_branch
    %9 = sbr.rel (0) target = $region5
  $region4: #{net_forward.1} parent=0 // pred_region
    _
  $region5: #{net_forward.1} parent=0 // pred_fallthru
    _
  // Predicated region
  $region6: #{net_forward.1} parent=0 // pred_check
    _
  $region7: #{net_forward.1} parent=0 // pred_check_branch
    %11 = sbr.rel (0) target = $region9
  $region8: #{net_forward.1} parent=0 // pred_region
    _
  $region9: #{net_forward.1} parent=0 // pred_fallthru
    _
  // Predicated region
  $region10: #{net_forward.1} parent=0 // pred_check
    _
  $region11: #{net_forward.1} parent=0 // pred_check_branch
    %13 = sbr.rel (0) target = $region13
  $region12: #{net_forward.1} parent=0 // pred_region
    _
  $region13: #{net_forward.1} parent=0 // pred_fallthru
    _
  %v14 = vld [vmem:[%s0] sm:$0xff]
  %v15 = vld [vmem:[%s1] sm:$0xff]
  %v16 = vld [vmem:[%s1 + $0x8] sm:$0x1]
  %vm17 = vcmask 72704
  %v19 = vsel %vm17, %v14, 0
  %vm21 = vcmask 1040384
  %v23 = vsel %vm21, %v16, 0
  %25 = vmatprep.subr.mxu0 0.0
  %26 = vmatpush1.msra.mxu0 0.0
  %27 = vmatprep.subr.mxu0 0.0
  %28 = vmatpush1.msra.mxu0 0.0
  %29 = vmatprep.subr.mxu0 0.0
  %30 = vmatpush1.msra.mxu0 0.0
  %31 = vmatprep.subr.mxu0 0.0
  %32 = vmatpush1.msra.mxu0 0.0
  %33 = vmatprep.subr.mxu0 0.0
  %34 = vmatpush1.msra.mxu0 0.0
  %35 = vmatprep.subr.mxu0 0.0
  %36 = vmatpush1.msra.mxu0 0.0
  %37 = vmatprep.subr.mxu0 0.0
  %38 = vmatpush1.msra.mxu0 0.0
  %39 = vmatprep.subr.mxu0 0.0
  %40 = vmatpush1.msra.mxu0 0.0
  %41 = vmatprep.subr.mxu0 0.0
  %42 = vmatpush1.msra.mxu0 0.0
  %43 = vmatprep.subr.mxu0 0.0
  %44 = vmatpush1.msra.mxu0 0.0
  %45 = vmatprep.subr.mxu0 0.0
  %46 = vmatpush1.msra.mxu0 0.0
  %47 = vmatprep.subr.mxu0 0.0
  %48 = vmatpush1.msra.mxu0 0.0
  %49 = vmatprep.subr.mxu0 0.0
  %50 = vmatpush1.msra.mxu0 0.0
  %51 = vmatprep.subr.mxu0 0.0
  %52 = vmatpush1.msra.mxu0 0.0
  %53 = vmatprep.subr.mxu0 0.0
  %54 = vmatpush1.msra.mxu0 %v23
  %55 = vmatprep.subr.mxu0 0.0
  %56 = vmatpush1.msra.mxu0 %v15
  %57 = vmatprep.subr.mxu0 0.0
  %58 = vmatpush2.msra.mxu0 0.0
  %59 = vmatprep.subr.mxu0 0.0
  %60 = vmatpush2.msra.mxu0 0.0
  %61 = vmatprep.subr.mxu0 0.0
  %62 = vmatpush2.msra.mxu0 0.0
  %63 = vmatprep.subr.mxu0 0.0
  %64 = vmatpush2.msra.mxu0 0.0
  %65 = vmatprep.subr.mxu0 0.0
  %66 = vmatpush2.msra.mxu0 0.0
  %67 = vmatprep.subr.mxu0 0.0
  %68 = vmatpush2.msra.mxu0 0.0
  %69 = vmatprep.subr.mxu0 0.0
  %70 = vmatpush2.msra.mxu0 0.0
  %71 = vmatprep.subr.mxu0 0.0
  %72 = vmatpush2.msra.mxu0 0.0
  %73 = vmatprep.subr.mxu0 0.0
  %74 = vmatpush2.msra.mxu0 0.0
  %75 = vmatprep.subr.mxu0 0.0
  %76 = vmatpush2.msra.mxu0 0.0
  %77 = vmatprep.subr.mxu0 0.0
  %78 = vmatpush2.msra.mxu0 0.0
  %79 = vmatprep.subr.mxu0 0.0
  %80 = vmatpush2.msra.mxu0 0.0
  %81 = vmatprep.subr.mxu0 0.0
  %82 = vmatpush2.msra.mxu0 0.0
  %83 = vmatprep.subr.mxu0 0.0
  %84 = vmatpush2.msra.mxu0 0.0
  %85 = vmatprep.subr.mxu0 0.0
  %86 = vmatpush2.msra.mxu0 0.0
  %87 = vmatprep.subr.mxu0 0.0
  %88 = vmatpush2.msra.mxu0 0.0
  %89 = vmatprep.mubr.f32.mxu0 0.0
  %90 = vmatmul.mubr.f32.gmra.mxu0 %v19
  %v91 = vpop.f32.mrf.mxu0
  %v92 = vadd.f32 0.0, %v91
  %v93 = vpop.f32.mrf.mxu0
  %94 = vdwg.mxu0
  %v95 = vmax.f32 %v92, 0.0
  %v96 = vld [vmem:[%s2] sm:$0xff]
  %v97 = vld [vmem:[%s2 + $0x8] sm:$0xff]
  %v98 = vld [vmem:[%s2 + $0x10] sm:$0x1]
  %vm99 = vcmask 138240
  %v101 = vsel %vm99, %v95, 0
  %v104 = vsel %vm21, %v98, 0
  %106 = vmatprep.subr.mxu0 0.0
  %107 = vmatpush1.msra.mxu0 0.0
  %108 = vmatprep.subr.mxu0 0.0
  %109 = vmatpush1.msra.mxu0 0.0
  %110 = vmatprep.subr.mxu0 0.0
  %111 = vmatpush1.msra.mxu0 0.0
  %112 = vmatprep.subr.mxu0 0.0
  %113 = vmatpush1.msra.mxu0 0.0
  %114 = vmatprep.subr.mxu0 0.0
  %115 = vmatpush1.msra.mxu0 0.0
  %116 = vmatprep.subr.mxu0 0.0
  %117 = vmatpush1.msra.mxu0 0.0
  %118 = vmatprep.subr.mxu0 0.0
  %119 = vmatpush1.msra.mxu0 0.0
  %120 = vmatprep.subr.mxu0 0.0
  %121 = vmatpush1.msra.mxu0 0.0
  %122 = vmatprep.subr.mxu0 0.0
  %123 = vmatpush1.msra.mxu0 0.0
  %124 = vmatprep.subr.mxu0 0.0
  %125 = vmatpush1.msra.mxu0 0.0
  %126 = vmatprep.subr.mxu0 0.0
  %127 = vmatpush1.msra.mxu0 0.0
  %128 = vmatprep.subr.mxu0 0.0
  %129 = vmatpush1.msra.mxu0 0.0
  %130 = vmatprep.subr.mxu0 0.0
  %131 = vmatpush1.msra.mxu0 0.0
  %132 = vmatprep.subr.mxu0 0.0
  %133 = vmatpush1.msra.mxu0 %v104
  %134 = vmatprep.subr.mxu0 0.0
  %135 = vmatpush1.msra.mxu0 %v97
  %136 = vmatprep.subr.mxu0 0.0
  %137 = vmatpush1.msra.mxu0 %v96
  %138 = vmatprep.subr.mxu0 0.0
  %139 = vmatpush2.msra.mxu0 0.0
  %140 = vmatprep.subr.mxu0 0.0
  %141 = vmatpush2.msra.mxu0 0.0
  %142 = vmatprep.subr.mxu0 0.0
  %143 = vmatpush2.msra.mxu0 0.0
  %144 = vmatprep.subr.mxu0 0.0
  %145 = vmatpush2.msra.mxu0 0.0
  %146 = vmatprep.subr.mxu0 0.0
  %147 = vmatpush2.msra.mxu0 0.0
  %148 = vmatprep.subr.mxu0 0.0
  %149 = vmatpush2.msra.mxu0 0.0
  %150 = vmatprep.subr.mxu0 0.0
  %151 = vmatpush2.msra.mxu0 0.0
  %152 = vmatprep.subr.mxu0 0.0
  %153 = vmatpush2.msra.mxu0 0.0
  %154 = vmatprep.subr.mxu0 0.0
  %155 = vmatpush2.msra.mxu0 0.0
  %156 = vmatprep.subr.mxu0 0.0
  %157 = vmatpush2.msra.mxu0 0.0
  %158 = vmatprep.subr.mxu0 0.0
  %159 = vmatpush2.msra.mxu0 0.0
  %160 = vmatprep.subr.mxu0 0.0
  %161 = vmatpush2.msra.mxu0 0.0
  %162 = vmatprep.subr.mxu0 0.0
  %163 = vmatpush2.msra.mxu0 0.0
  %164 = vmatprep.subr.mxu0 0.0
  %165 = vmatpush2.msra.mxu0 0.0
  %166 = vmatprep.subr.mxu0 0.0
  %167 = vmatpush2.msra.mxu0 0.0
  %168 = vmatprep.subr.mxu0 0.0
  %169 = vmatpush2.msra.mxu0 0.0
  %170 = vmatprep.mubr.f32.mxu0 0.0
  %171 = vmatmul.mubr.f32.gmra.mxu0 %v101
  %v172 = vpop.f32.mrf.mxu0
  %v173 = vadd.f32 0.0, %v172
  %v174 = vpop.f32.mrf.mxu0
  %175 = vdwg.mxu0
  %176 = vst [vmem:[%s3] sm:$0xff] %v173
  // Predicated region
  $region14: #{net_forward.1} parent=0 // pred_check
    _
  $region15: #{net_forward.1} parent=0 // pred_check_branch
    %178 = sbr.rel (0) target = $region17
  $region16: #{net_forward.1} parent=0 // pred_region
    _
  $region17: #{net_forward.1} parent=0 // pred_fallthru
    _
  // Predicated region
  $region18: #{net_forward.1} parent=0 // pred_check
    _
  $region19: #{net_forward.1} parent=0 // pred_check_branch
    %180 = sbr.rel (0) target = $region21
  $region20: #{net_forward.1} parent=0 // pred_region
    _
  $region21: #{net_forward.1} parent=0 // pred_fallthru
    _

</llo_original>
